<compile_context>
chip_gen: v5e
topology: v5e:2x2
jax: 0.10.0
libtpu: 0.0.40
codegen_flags: <defaults>
</compile_context>

<pallas_src>
import jax
import jax.numpy as jnp
from jax.experimental import pallas as pl
from jax.experimental.pallas import tpu as pltpu

# Fixed parameters from the PyTorch module's __init__.
WEIGHT = 0.5
BIAS = 0.2

# Trace-time tiling constants.
TARGET_TILE_ELEMS = 2048 * 1024   # 8 MiB per f32 tile
MIN_TILE_ELEMS = 256 * 1024       # 1 MiB -- below this per-step overhead starts to matter
VMEM_LIMIT_BYTES = 48 << 20       # 2 in + 2 out double buffers @ 8 MiB = 32 MiB, + headroom
                                  # (fits v5e/v6e 128 MiB and v7x 64 MiB physical VMEM)


def _affine_kernel(x_ref, o_ref):
    # y = w*x + b with constants folded in (single fused VPU expression).
    o_ref[...] = x_ref[...] * jnp.float32(WEIGHT) + jnp.float32(BIAS)


def _round_up(a, b):
    return ((a + b - 1) // b) * b


def _choose_layout(total):
    """Pick (lane_w, tile_rows, padded_total) with at most one pad pass.

    Guarantees: lane_w is a multiple of 128 (lane-dense, unmasked stores),
    tile_rows is a multiple of 8 or equals the full row count, and
    tile_rows divides padded_total // lane_w exactly.
    """
    lane_w = None
    for cand in (1024, 512, 256, 128):
        if total % cand == 0:
            lane_w = cand
            break

    if lane_w is not None:
        rows = total // lane_w
        max_tile_rows = max(8, TARGET_TILE_ELEMS // lane_w)
        if rows <= max_tile_rows:
            # Single block covering the whole array: no padding, no (8,128) issue.
            return lane_w, rows, total
        min_tile_rows = max(8, MIN_TILE_ELEMS // lane_w)
        if rows % 8 == 0:
            # Largest multiple-of-8 divisor of rows within [min, max] -> no padding.
            start = (min(max_tile_rows, rows) // 8) * 8
            for d in range(start, min_tile_rows - 1, -8):
                if rows % d == 0:
                    return lane_w, d, total
        # No good divisor: pad once to a whole number of max-size tiles.
        tile_rows = max_tile_rows
        return lane_w, tile_rows, _round_up(total, tile_rows * lane_w)

    # total is not a multiple of 128: one pad, lane_w = 128.
    lane_w = 128
    max_tile_rows = max(8, TARGET_TILE_ELEMS // lane_w)
    rows_up = -(-total // lane_w)
    if rows_up <= max_tile_rows:
        return lane_w, rows_up, rows_up * lane_w            # single block, one pad
    tile_rows = max_tile_rows
    return lane_w, tile_rows, _round_up(total, tile_rows * lane_w)


def _conv1x1_impl(x_nchw):
    """Equivalent of nn.Conv2d(1, 1, kernel_size=1) with weight=0.5, bias=0.2.

    x_nchw: (N, 1, H, W) float32 -> (N, 1, H, W) float32.
    """
    shape = x_nchw.shape
    N, C, H, W = shape
    assert C == 1, "module has in_channels=1"
    total = N * C * H * W

    lane_w, tile_rows, padded_total = _choose_layout(total)
    rows = padded_total // lane_w
    grid = (rows // tile_rows,)

    flat = x_nchw.reshape(total)
    if padded_total != total:
        flat = jnp.pad(flat, (0, padded_total - total))      # at most one pad pass
    x2d = flat.reshape(rows, lane_w)

    out2d = pl.pallas_call(
        _affine_kernel,
        out_shape=jax.ShapeDtypeStruct((rows, lane_w), x2d.dtype),
        grid=grid,
        in_specs=[pl.BlockSpec((tile_rows, lane_w), lambda i: (i, 0))],
        out_specs=pl.BlockSpec((tile_rows, lane_w), lambda i: (i, 0)),
        # Elementwise, same shape/dtype: reuse the input's HBM allocation for the output.
        input_output_aliases={0: 0},
        compiler_params=pltpu.CompilerParams(
            # Every grid step is independent -> lets v7x shard row tiles across both
            # TensorCores (harmless no-op on v5e/v6e).
            dimension_semantics=("parallel",),
            vmem_limit_bytes=VMEM_LIMIT_BYTES,
        ),
        cost_estimate=pl.CostEstimate(
            flops=2 * padded_total,
            transcendentals=0,
            bytes_accessed=8 * padded_total,   # read N f32 + write N f32
        ),
    )(x2d)

    if padded_total == total:
        return out2d.reshape(shape)            # pure bitcast, no extra HBM pass
    return out2d.reshape(-1)[:total].reshape(shape)


# One dispatch for the whole op; donate the input so the aliased pallas output
# reuses its HBM buffer (no second full-size allocation).
conv1x1 = jax.jit(_conv1x1_impl, donate_argnums=(0,))


if __name__ == "__main__":
    key = jax.random.PRNGKey(0)
    # Small NCHW input consistent with Conv2d(1, 1, kernel_size=1): channels must be 1.
    in_shape = (2, 1, 16, 16)
    x = jax.random.normal(key, in_shape, dtype=jnp.float32)

    # Compute the analytic reference BEFORE the call (the input buffer is donated).
    ref = WEIGHT * x + BIAS

    y = conv1x1(x)
    y = jax.block_until_ready(y)

    assert y.shape == in_shape and y.dtype == jnp.float32
    assert jnp.allclose(y, ref, atol=1e-6), "mismatch vs reference"

    print("KERNEL_OK")
</pallas_src>

<mosaic_0001>
module attributes {stable_mosaic.version = 11 : i64} {
  func.func @_affine_kernel(%arg0: i32, %arg1: memref<1x512xf32, #tpu.memory_space<vmem>>, %arg2: memref<1x512xf32, #tpu.memory_space<vmem>>) attributes {dimension_semantics = [#tpu.dimension_semantics<parallel>], iteration_bounds = array<i64: 1>, scalar_prefetch = 0 : i64, scratch_operands = 0 : i64, tpu.core_type = #tpu.core_type<tc>, window_params = [{transform_indices = @transform_0, window_bounds = array<i64: 1, 512>}, {transform_indices = @transform_1, window_bounds = array<i64: 1, 512>}]} {
    %c0 = arith.constant 0 : index
    %c0_0 = arith.constant 0 : index
    %0 = vector.load %arg1[%c0, %c0_0] : memref<1x512xf32, #tpu.memory_space<vmem>>, vector<1x512xf32>
    %cst = arith.constant 5.000000e-01 : f32
    %1 = vector.broadcast %cst : f32 to vector<1x512xf32>
    %2 = arith.mulf %0, %1 : vector<1x512xf32>
    %cst_1 = arith.constant 2.000000e-01 : f32
    %3 = vector.broadcast %cst_1 : f32 to vector<1x512xf32>
    %4 = arith.addf %2, %3 : vector<1x512xf32>
    %c0_2 = arith.constant 0 : index
    %c0_3 = arith.constant 0 : index
    %5 = vector.load %arg2[%c0_2, %c0_3] : memref<1x512xf32, #tpu.memory_space<vmem>>, vector<1x512xf32>
    tpu.vector_store %arg2[%c0_2, %c0_3], %4 {strides = array<i32>} : memref<1x512xf32, #tpu.memory_space<vmem>>, vector<1x512xf32>,
    return
  }
  func.func @transform_0(%arg0: i32) -> (i32, i32) {
    %c0_i32 = arith.constant 0 : i32
    %c0_i32_0 = arith.constant 0 : i32
    return %arg0, %c0_i32 : i32, i32
  }
  func.func @transform_1(%arg0: i32) -> (i32, i32) {
    %c0_i32 = arith.constant 0 : i32
    %c0_i32_0 = arith.constant 0 : i32
    return %arg0, %c0_i32 : i32, i32
  }
}

</mosaic_0001>

<llo_original>
// kernel: _conv1x1_impl.1
$region0: #{_conv1x1_impl.1}
  #allocation0 [shape = 'u32[]', space=smem, size = 0x4, offset = 0x4, fixed_abs, tag = 'smem constant byte address 0x4 - core index']
  #allocation1 [shape = 'u32[72,128]{1,0:T(1,128)}', space=vmem, size = 0x9000, scoped, tag = 'internal scratch']
  %s0 = inlined_call_operand.vmem [shape: f32[1,512], index: 0, kind: input, shape index: {}, may-alias: {0,1}]
  %s1 = inlined_call_operand.vmem [shape: f32[1,512], index: 1, kind: output, shape index: {}, may-alias: {0,1}]
  %s2 = sld [smem:[#allocation0]]
  $region14: #{_conv1x1_impl.1} parent=0
    _
  %s4 = ssub.s32 1, %s2
  %s5 = scalar_select 0, %s4, %s2
  // Predicated region
  $region2: #{_conv1x1_impl.1} parent=0 // pred_check
    _
  $region3: #{_conv1x1_impl.1} parent=0 // pred_check_branch
    %7 = sbr.rel (0) target = $region5
  $region4: #{_conv1x1_impl.1} parent=0 // pred_region
    _
  $region5: #{_conv1x1_impl.1} parent=0 // pred_fallthru
    _
  %v8 = vld [vmem:[%s0] sm:$0xf]
  %v9 = vmul.f32 %v8, 0.5
  %v10 = vadd.f32 %v9, 0.2
  %v11 = vlaneseq
  %vm12 = vcmp.ge.s32.totalorder %v11, 0
  %vm13 = vcmp.lt.s32.totalorder %v11, 512
  %vm14 = vmand %vm12, %vm13
  %15 = vst.msk [vmem:[%s1] sm:$0xf] %vm14, %v10
  // Predicated region
  $region6: #{_conv1x1_impl.1} parent=0 // pred_check
    _
  $region7: #{_conv1x1_impl.1} parent=0 // pred_check_branch
    %17 = sbr.rel (0) target = $region9
  $region8: #{_conv1x1_impl.1} parent=0 // pred_region
    _
  $region9: #{_conv1x1_impl.1} parent=0 // pred_fallthru
    _
  // Predicated region
  $region10: #{_conv1x1_impl.1} parent=0 // pred_check
    _
  $region11: #{_conv1x1_impl.1} parent=0 // pred_check_branch
    %19 = sbr.rel (0) target = $region13
  $region12: #{_conv1x1_impl.1} parent=0 // pred_region
    _
  $region13: #{_conv1x1_impl.1} parent=0 // pred_fallthru
    _

</llo_original>
